<compile_context>
chip_gen: v7x
topology: tpu7x:2x2x1
jax: 0.10.0
libtpu: 0.0.40
codegen_flags: <defaults>
</compile_context>

<pallas_src>
import functools

import jax
import jax.numpy as jnp
from jax.experimental import pallas as pl
from jax.experimental.pallas import tpu as pltpu


def _round_up(x, m):
    return ((x + m - 1) // m) * m


def _pick_tile(dim_pad, candidates):
    for c in candidates:
        if dim_pad % c == 0:
            return c
    return dim_pad


# --------------------------------------------------------------------------
# Pallas kernels
# --------------------------------------------------------------------------

def _gemm_bn_kernel(a_ref, b_ref, scale_ref, shift_ref, *rest, relu,
                    has_residual):
    """M/N/K-tiled GEMM; fp32 output block doubles as the accumulator.

    Epilogue (folded BN affine + optional residual + optional ReLU) is applied
    in place on the last K step.
    """
    if has_residual:
        res_ref, o_ref = rest
    else:
        (o_ref,) = rest

    k = pl.program_id(2)

    @pl.when(k == 0)
    def _():
        o_ref[...] = jnp.zeros_like(o_ref)

    o_ref[...] += jnp.dot(a_ref[...], b_ref[...],
                          preferred_element_type=jnp.float32)

    @pl.when(k == pl.num_programs(2) - 1)
    def _():
        y = o_ref[...] * scale_ref[...] + shift_ref[...]
        if has_residual:
            y = y + res_ref[...]
        if relu:
            y = jnp.maximum(y, 0.0)
        o_ref[...] = y


def _normalize_kernel(x_ref, m_ref, s_ref, o_ref):
    # (x - mean) * inv_std ; mean / inv_std are (rows, 1) columns broadcast
    # across lanes inside the kernel (no full-size broadcast in HBM).
    o_ref[...] = (x_ref[...] - m_ref[...]) * s_ref[...]


def _maxpool_kernel(q00_ref, q01_ref, q10_ref, q11_ref, o_ref):
    # q.. are the 2x2 space-to-depth quadrants of the (-inf padded) input;
    # the 3x3/stride-2 window max becomes a max over 9 contiguous slices.
    OH, OW = o_ref.shape[1], o_ref.shape[2]
    q00 = q00_ref[...]
    q01 = q01_ref[...]
    q10 = q10_ref[...]
    q11 = q11_ref[...]
    m = q11[:, :OH, :OW, :]
    m = jnp.maximum(m, q10[:, :OH, :OW, :])
    m = jnp.maximum(m, q10[:, :OH, 1:OW + 1, :])
    m = jnp.maximum(m, q01[:, :OH, :OW, :])
    m = jnp.maximum(m, q01[:, 1:OH + 1, :OW, :])
    m = jnp.maximum(m, q00[:, :OH, :OW, :])
    m = jnp.maximum(m, q00[:, :OH, 1:OW + 1, :])
    m = jnp.maximum(m, q00[:, 1:OH + 1, :OW, :])
    m = jnp.maximum(m, q00[:, 1:OH + 1, 1:OW + 1, :])
    o_ref[...] = m


# --------------------------------------------------------------------------
# Pallas wrappers
# --------------------------------------------------------------------------

def conv_gemm(a, pc, *, relu, residual=None):
    """a: (M, K) activations/patches; pc: prepared conv (padded bf16 W + folded BN)."""
    M, K = a.shape
    K_pad, N_pad = pc['w'].shape
    Nc = pc['N']

    # M tiling: single tile for small M, 256-row tiles for large M.
    M8 = _round_up(max(M, 8), 8)
    if M8 <= 512:
        tm, M_pad = M8, M8
    else:
        tm = 256
        M_pad = _round_up(M, tm)
    tn = _pick_tile(N_pad, (256, 128))
    tk = _pick_tile(K_pad, (512, 384, 256, 128))

    if M == M_pad and K == K_pad:
        a_p = a.astype(jnp.bfloat16)
    else:
        a_p = jnp.zeros((M_pad, K_pad), jnp.bfloat16).at[:M, :K].set(
            a.astype(jnp.bfloat16))

    in_specs = [
        pl.BlockSpec((tm, tk), lambda i, j, k: (i, k)),
        pl.BlockSpec((tk, tn), lambda i, j, k: (k, j)),
        pl.BlockSpec((1, tn), lambda i, j, k: (0, j)),
        pl.BlockSpec((1, tn), lambda i, j, k: (0, j)),
    ]
    args = [a_p, pc['w'], pc['scale'], pc['shift']]

    has_residual = residual is not None
    if has_residual:
        if residual.shape == (M_pad, N_pad):
            res_p = residual.astype(jnp.float32)
        else:
            res_p = jnp.zeros((M_pad, N_pad), jnp.float32).at[:M, :Nc].set(
                residual.astype(jnp.float32))
        in_specs.append(pl.BlockSpec((tm, tn), lambda i, j, k: (i, j)))
        args.append(res_p)

    kernel = functools.partial(_gemm_bn_kernel, relu=relu,
                               has_residual=has_residual)

    out = pl.pallas_call(
        kernel,
        out_shape=jax.ShapeDtypeStruct((M_pad, N_pad), jnp.float32),
        grid_spec=pltpu.PrefetchScalarGridSpec(
            num_scalar_prefetch=0,
            grid=(M_pad // tm, N_pad // tn, K_pad // tk),
            in_specs=in_specs,
            out_specs=pl.BlockSpec((tm, tn), lambda i, j, k: (i, j)),
        ),
        compiler_params=pltpu.CompilerParams(
            dimension_semantics=("parallel", "parallel", "arbitrary")),
    )(*args)
    return out[:M, :Nc]


def normalize_f(in_f, mean, std):
    """(in_f - mean) / std, per-channel, NCHW in/out."""
    N, C, H, W = in_f.shape
    x = in_f.reshape(N * C, H * W).astype(jnp.float32)
    m_col = jnp.tile(mean, N).reshape(N * C, 1).astype(jnp.float32)
    s_col = jnp.tile(1.0 / std, N).reshape(N * C, 1).astype(jnp.float32)
    out = pl.pallas_call(
        _normalize_kernel,
        out_shape=jax.ShapeDtypeStruct((N * C, H * W), jnp.float32),
        grid=(1,),
        in_specs=[pl.BlockSpec((N * C, H * W), lambda i: (0, 0)),
                  pl.BlockSpec((N * C, 1), lambda i: (0, 0)),
                  pl.BlockSpec((N * C, 1), lambda i: (0, 0))],
        out_specs=pl.BlockSpec((N * C, H * W), lambda i: (0, 0)),
    )(x, m_col, s_col)
    return out.reshape(N, C, H, W)


def maxpool_3x3_s2_p1(x_nhwc):
    """PyTorch MaxPool2d(kernel_size=3, stride=2, padding=1) on NHWC data."""
    N, H, W, C = x_nhwc.shape
    OH = (H + 2 - 3) // 2 + 1
    OW = (W + 2 - 3) // 2 + 1
    Hp = _round_up(H + 2, 2)
    Wp = _round_up(W + 2, 2)
    xp = jnp.full((N, Hp, Wp, C), -jnp.inf, jnp.float32)
    xp = xp.at[:, 1:H + 1, 1:W + 1, :].set(x_nhwc.astype(jnp.float32))
    # 2x2 space-to-depth: quadrant[ry][rx][n,i,j,c] = xp[n, 2i+ry, 2j+rx, c]
    q = xp.reshape(N, Hp // 2, 2, Wp // 2, 2, C)
    q00 = q[:, :, 0, :, 0, :]
    q01 = q[:, :, 0, :, 1, :]
    q10 = q[:, :, 1, :, 0, :]
    q11 = q[:, :, 1, :, 1, :]
    H2, W2 = Hp // 2, Wp // 2

    qspec = pl.BlockSpec((1, H2, W2, C), lambda n: (n, 0, 0, 0))
    out = pl.pallas_call(
        _maxpool_kernel,
        out_shape=jax.ShapeDtypeStruct((N, OH, OW, C), jnp.float32),
        grid=(N,),
        in_specs=[qspec, qspec, qspec, qspec],
        out_specs=pl.BlockSpec((1, OH, OW, C), lambda n: (n, 0, 0, 0)),
        compiler_params=pltpu.CompilerParams(
            dimension_semantics=("parallel",)),
    )(q00, q01, q10, q11)
    return out.reshape(N * OH * OW, C), (N, OH, OW)


# --------------------------------------------------------------------------
# Glue: im2col + weight / BN preparation
# --------------------------------------------------------------------------

def _im2col(x_nhwc, kh, kw, stride, pad):
    N, H, W, C = x_nhwc.shape
    OH = (H + 2 * pad - kh) // stride + 1
    OW = (W + 2 * pad - kw) // stride + 1
    xp = jnp.pad(x_nhwc, ((0, 0), (pad, pad), (pad, pad), (0, 0)))
    cols = []
    for dy in range(kh):
        for dx in range(kw):
            cols.append(xp[:, dy:dy + stride * OH:stride,
                           dx:dx + stride * OW:stride, :])
    patches = jnp.stack(cols, axis=3)  # (N, OH, OW, kh*kw, C)
    return patches.reshape(N * OH * OW, kh * kw * C), (N, OH, OW)


def _conv_weight_to_gemm(w_oihw):
    # PyTorch (Cout, Cin, KH, KW) -> (KH*KW*Cin, Cout), matching _im2col order.
    return jnp.transpose(w_oihw, (2, 3, 1, 0)).reshape(-1, w_oihw.shape[0])


def _prep_conv_bn(w_oihw, bn, eps=1e-5):
    """Pre-transform weight to padded bf16 GEMM layout and fold BN once."""
    w = _conv_weight_to_gemm(w_oihw).astype(jnp.float32)
    K, Nc = w.shape
    K_pad = _round_up(K, 128)
    N_pad = _round_up(Nc, 128)
    w_p = jnp.zeros((K_pad, N_pad), jnp.bfloat16).at[:K, :Nc].set(
        w.astype(jnp.bfloat16))
    scale = bn['gamma'] / jnp.sqrt(bn['var'] + eps)
    shift = bn['beta'] - bn['mean'] * scale
    sc = jnp.zeros((1, N_pad), jnp.float32).at[0, :Nc].set(scale)
    sh = jnp.zeros((1, N_pad), jnp.float32).at[0, :Nc].set(shift)
    return {'w': w_p, 'scale': sc, 'shift': sh, 'K': K, 'N': Nc}


# --------------------------------------------------------------------------
# Parameter construction (deterministic, in-script)
# --------------------------------------------------------------------------

class KeyGen:
    def __init__(self, seed):
        self.key = jax.random.PRNGKey(seed)

    def __call__(self):
        self.key, sub = jax.random.split(self.key)
        return sub


def _make_conv(kg, cout, cin, kh, kw):
    fan_in = cin * kh * kw
    return jax.random.normal(kg(), (cout, cin, kh, kw), jnp.float32) / jnp.sqrt(fan_in)


def _make_bn(kg, c):
    return {
        'gamma': 1.0 + 0.1 * jax.random.normal(kg(), (c,), jnp.float32),
        'beta': 0.1 * jax.random.normal(kg(), (c,), jnp.float32),
        'mean': 0.1 * jax.random.normal(kg(), (c,), jnp.float32),
        'var': 1.0 + 0.1 * jax.random.uniform(kg(), (c,), jnp.float32),
    }


def _make_bottleneck(kg, cin, width, cout, downsample):
    p = {
        'w1': _make_conv(kg, width, cin, 1, 1), 'bn1': _make_bn(kg, width),
        'w2': _make_conv(kg, width, width, 3, 3), 'bn2': _make_bn(kg, width),
        'w3': _make_conv(kg, cout, width, 1, 1), 'bn3': _make_bn(kg, cout),
    }
    if downsample:
        p['wd'] = _make_conv(kg, cout, cin, 1, 1)
        p['bnd'] = _make_bn(kg, cout)
    return p


def init_params(seed=0):
    kg = KeyGen(seed)
    params = {
        'conv1': _make_conv(kg, 64, 3, 7, 7),   # resnet.conv1 (3 -> 64, 7x7, s2, p3)
        'bn1': _make_bn(kg, 64),
        'mean': jnp.array([0.485, 0.456, 0.406], jnp.float32),
        'std': jnp.array([0.229, 0.224, 0.225], jnp.float32),
    }
    # ResNet-50: layer1 (3 blocks), layer2 (4 blocks), layer3 (6 blocks)
    layer_cfg = [('res2', 3, 64, 64, 256),
                 ('res3', 4, 256, 128, 512),
                 ('res4', 6, 512, 256, 1024)]
    for name, nblocks, cin, width, cout in layer_cfg:
        blocks, in_ch = [], cin
        for bi in range(nblocks):
            blocks.append(_make_bottleneck(kg, in_ch, width, cout, bi == 0))
            in_ch = cout
        params[name] = blocks
    return params


def prepare_params(params):
    """One-time preparation: GEMM-layout bf16 weights, folded/padded BN."""
    prep = {
        'stem': _prep_conv_bn(params['conv1'], params['bn1']),
        'mean': params['mean'],
        'std': params['std'],
    }
    for name in ('res2', 'res3', 'res4'):
        blocks = []
        for p in params[name]:
            blk = {'c1': _prep_conv_bn(p['w1'], p['bn1']),
                   'c2': _prep_conv_bn(p['w2'], p['bn2']),
                   'c3': _prep_conv_bn(p['w3'], p['bn3'])}
            if 'wd' in p:
                blk['cd'] = _prep_conv_bn(p['wd'], p['bnd'])
            blocks.append(blk)
        prep[name] = blocks
    return prep


# --------------------------------------------------------------------------
# Forward pass
# --------------------------------------------------------------------------

def _bottleneck_forward(x_flat, nhw, blk, stride):
    N, H, W = nhw
    cin = blk['c1']['K']
    width = blk['c1']['N']

    # 1x1 conv + BN + ReLU
    out = conv_gemm(x_flat, blk['c1'], relu=True)

    # 3x3 conv (carries the stride) + BN + ReLU
    a, (N2, OH, OW) = _im2col(out.reshape(N, H, W, width), 3, 3, stride, 1)
    out = conv_gemm(a, blk['c2'], relu=True)

    # identity / downsample path
    if 'cd' in blk:
        x_s = x_flat.reshape(N, H, W, cin)[:, ::stride, ::stride, :].reshape(-1, cin)
        identity = conv_gemm(x_s, blk['cd'], relu=False)
    else:
        identity = x_flat

    # 1x1 conv + BN, add residual, then ReLU (fused epilogue)
    out = conv_gemm(out, blk['c3'], relu=True, residual=identity)
    return out, (N2, OH, OW)


def encoder_q_forward(prep, in_f):
    # f = (in_f - mean) / std
    f = normalize_f(in_f, prep['mean'], prep['std'])

    # conv1 -> bn1 -> relu  (fused in the GEMM epilogue)
    x_nhwc = jnp.transpose(f, (0, 2, 3, 1))
    a, (N, OH, OW) = _im2col(x_nhwc, 7, 7, 2, 3)
    c1_flat = conv_gemm(a, prep['stem'], relu=True)
    c1_nhwc = c1_flat.reshape(N, OH, OW, 64)

    # maxpool 3x3 / stride 2 / pad 1
    x_flat, nhw = maxpool_3x3_s2_p1(c1_nhwc)

    feats = {}
    first_stride = {'res2': 1, 'res3': 2, 'res4': 2}
    for name in ('res2', 'res3', 'res4'):
        for bi, blk in enumerate(prep[name]):
            st = first_stride[name] if bi == 0 else 1
            x_flat, nhw = _bottleneck_forward(x_flat, nhw, blk, st)
        feats[name] = (x_flat, nhw)

    def to_nchw(flat, shp, c):
        n_, h_, w_ = shp
        return jnp.transpose(flat.reshape(n_, h_, w_, c), (0, 3, 1, 2))

    r2 = to_nchw(*feats['res2'], 256)
    r3 = to_nchw(*feats['res3'], 512)
    r4 = to_nchw(*feats['res4'], 1024)
    c1 = jnp.transpose(c1_nhwc, (0, 3, 1, 2))
    return r4, r3, r2, c1, f


# --------------------------------------------------------------------------

if __name__ == "__main__":
    key = jax.random.PRNGKey(0)
    N, H, W = 2, 16, 16
    in_f = jax.random.uniform(key, (N, 3, H, W), jnp.float32)

    params = init_params(0)
    prep = prepare_params(params)

    outs = jax.block_until_ready(encoder_q_forward(prep, in_f))
    r4, r3, r2, c1, f = outs

    assert r4.shape == (N, 1024, 1, 1), r4.shape
    assert r3.shape == (N, 512, 2, 2), r3.shape
    assert r2.shape == (N, 256, 4, 4), r2.shape
    assert c1.shape == (N, 64, 8, 8), c1.shape
    assert f.shape == (N, 3, 16, 16), f.shape
    assert all(bool(jnp.all(jnp.isfinite(t))) for t in (r4, r3, r2, c1, f))
    print("KERNEL_OK")
</pallas_src>

<mosaic_0001>
module attributes {stable_mosaic.version = 11 : i64} {
  func.func @_normalize_kernel(%arg0: i32, %arg1: memref<6x256xf32, #tpu.memory_space<vmem>>, %arg2: memref<6x1xf32, #tpu.memory_space<vmem>>, %arg3: memref<6x1xf32, #tpu.memory_space<vmem>>, %arg4: memref<6x256xf32, #tpu.memory_space<vmem>>) attributes {dimension_semantics = [#tpu.dimension_semantics<arbitrary>], iteration_bounds = array<i64: 1>, scalar_prefetch = 0 : i64, scratch_operands = 0 : i64, tpu.core_type = #tpu.core_type<tc>, window_params = [{pipeline_mode = #tpu.pipeline_mode<synchronous>, transform_indices = @transform_0, window_bounds = array<i64: 6, 256>}, {pipeline_mode = #tpu.pipeline_mode<synchronous>, transform_indices = @transform_1, window_bounds = array<i64: 6, 1>}, {pipeline_mode = #tpu.pipeline_mode<synchronous>, transform_indices = @transform_2, window_bounds = array<i64: 6, 1>}, {pipeline_mode = #tpu.pipeline_mode<synchronous>, transform_indices = @transform_3, window_bounds = array<i64: 6, 256>}]} {
    %c0 = arith.constant 0 : index
    %c0_0 = arith.constant 0 : index
    %0 = vector.load %arg1[%c0, %c0_0] : memref<6x256xf32, #tpu.memory_space<vmem>>, vector<6x256xf32>
    %c0_1 = arith.constant 0 : index
    %c0_2 = arith.constant 0 : index
    %1 = vector.load %arg2[%c0_1, %c0_2] : memref<6x1xf32, #tpu.memory_space<vmem>>, vector<6x1xf32>
    %2 = vector.broadcast %1 : vector<6x1xf32> to vector<6x256xf32>
    %3 = arith.subf %0, %2 : vector<6x256xf32>
    %c0_3 = arith.constant 0 : index
    %c0_4 = arith.constant 0 : index
    %4 = vector.load %arg3[%c0_3, %c0_4] : memref<6x1xf32, #tpu.memory_space<vmem>>, vector<6x1xf32>
    %5 = vector.broadcast %4 : vector<6x1xf32> to vector<6x256xf32>
    %6 = arith.mulf %3, %5 : vector<6x256xf32>
    %c0_5 = arith.constant 0 : index
    %c0_6 = arith.constant 0 : index
    %7 = vector.load %arg4[%c0_5, %c0_6] : memref<6x256xf32, #tpu.memory_space<vmem>>, vector<6x256xf32>
    tpu.vector_store %arg4[%c0_5, %c0_6], %6 {strides = array<i32>} : memref<6x256xf32, #tpu.memory_space<vmem>>, vector<6x256xf32>,
    return
  }
  func.func @transform_0(%arg0: i32) -> (i32, i32) {
    %c0_i32 = arith.constant 0 : i32
    %c0_i32_0 = arith.constant 0 : i32
    %c0_i32_1 = arith.constant 0 : i32
    return %c0_i32, %c0_i32_0 : i32, i32
  }
  func.func @transform_1(%arg0: i32) -> (i32, i32) {
    %c0_i32 = arith.constant 0 : i32
    %c0_i32_0 = arith.constant 0 : i32
    %c0_i32_1 = arith.constant 0 : i32
    return %c0_i32, %c0_i32_0 : i32, i32
  }
  func.func @transform_2(%arg0: i32) -> (i32, i32) {
    %c0_i32 = arith.constant 0 : i32
    %c0_i32_0 = arith.constant 0 : i32
    %c0_i32_1 = arith.constant 0 : i32
    return %c0_i32, %c0_i32_0 : i32, i32
  }
  func.func @transform_3(%arg0: i32) -> (i32, i32) {
    %c0_i32 = arith.constant 0 : i32
    %c0_i32_0 = arith.constant 0 : i32
    %c0_i32_1 = arith.constant 0 : i32
    return %c0_i32, %c0_i32_0 : i32, i32
  }
}

</mosaic_0001>

<llo_original>
// kernel: tpu_custom_call.1
$region0: #{tpu_custom_call.1}
  #allocation0 [shape = 'u32[]', space=smem, size = 0x4, offset = 0x4, fixed_abs, tag = 'smem constant byte address 0x4 - core index']
  #allocation1 [shape = 'u32[144,128]{1,0:T(1,128)}', space=vmem, size = 0x12000, scoped, tag = 'internal scratch']
  %s0 = inlined_call_operand.vmem [shape: f32[6,256], index: 0, kind: input, shape index: {}]
  %s1 = inlined_call_operand.vmem [shape: f32[6,1], index: 1, kind: input, shape index: {}]
  %s2 = inlined_call_operand.vmem [shape: f32[6,1], index: 2, kind: input, shape index: {}]
  %s3 = inlined_call_operand.hbm [shape: f32[6,256], index: 3, kind: output, shape index: {}]
  %s4 = sld [smem:[#allocation0]]
  $region22: #{tpu_custom_call.1} parent=0
    _
  %s6 = ssub.s32 1, %s4
  %s7 = scalar_select 0, %s6, %s4
  $region1: #{tpu_custom_call.1} parent=0
    #allocation2 [shape = 'u8[8192]{0}', space=vmem, size = 0x2000, scoped, tag = 'output window, operand 0, single buffered']
    #allocation3 [shape = 's32[1]{0}', space=sflag, size = 0x4, scoped, tag = 'scoped memory for tpu_custom_call.1']
    %8 = vsyncpa [#allocation3], 0
    // Predicated region
    $region2: #{tpu_custom_call.1} parent=1 // pred_check
      _
    $region3: #{tpu_custom_call.1} parent=1 // pred_check_branch
      %10 = sbr.rel (0) target = $region5
    $region4: #{tpu_custom_call.1} parent=1 // pred_region
      _
    $region5: #{tpu_custom_call.1} parent=1 // pred_fallthru
      _
    // Predicated region
    $region6: #{tpu_custom_call.1} parent=1 // pred_check
      _
    $region7: #{tpu_custom_call.1} parent=1 // pred_check_branch
      %12 = sbr.rel (0) target = $region9
    $region8: #{tpu_custom_call.1} parent=1 // pred_region
      _
    $region9: #{tpu_custom_call.1} parent=1 // pred_fallthru
      _
    // Predicated region
    $region10: #{tpu_custom_call.1} parent=1 // pred_check
      _
    $region11: #{tpu_custom_call.1} parent=1 // pred_check_branch
      %14 = sbr.rel (0) target = $region13
    $region12: #{tpu_custom_call.1} parent=1 // pred_region
      _
    $region13: #{tpu_custom_call.1} parent=1 // pred_fallthru
      _
    %v15 = vld [vmem:[%s0] sm:$0x3f]
    %v16 = vld [vmem:[%s0 + $0x8] sm:$0x3f]
    %v17 = vld [vmem:[%s1] sm:$0x3f]
    %19 = vset.pattern.permute.xlu0 0
    %20 = vperm.xlu0 %19, %v17
    %v21 = vpop.permute.xlu0 %20
    %v23 = vsub.f32 %v15, %v21
    %v24 = vsub.f32 %v16, %v21
    %v25 = vld [vmem:[%s2] sm:$0x3f]
    %27 = vset.pattern.permute.xlu0 0
    %28 = vperm.xlu0 %27, %v25
    %v29 = vpop.permute.xlu0 %28
    %v31 = vmul.f32 %v23, %v29
    %v32 = vmul.f32 %v24, %v29
    %33 = vst [vmem:[#allocation2] sm:$0x3f] %v31
    %34 = vst [vmem:[#allocation2 + $0x8] sm:$0x3f] %v32
    // Predicated region
    $region14: #{tpu_custom_call.1} parent=1 // pred_check
      _
    $region15: #{tpu_custom_call.1} parent=1 // pred_check_branch
      %36 = sbr.rel (0) target = $region17
    $region16: #{tpu_custom_call.1} parent=1 // pred_region
      %s38 = ssub.s32 256, 256
      %39 = vsyncadd [#allocation3], %s38
      %s41 = sshll.u32 [#allocation2], 4
      %s42 = int_to_ptr.vmem [resolvable:$true] %s41
      %44 = dma.vmem_to_hbm [thread:$0]  %s42, 256, %s3, [#allocation3]
    $region17: #{tpu_custom_call.1} parent=1 // pred_fallthru
      _
    // Predicated region
    $region18: #{tpu_custom_call.1} parent=1 // pred_check
      _
    $region19: #{tpu_custom_call.1} parent=1 // pred_check_branch
      %46 = sbr.rel (0) target = $region21
    $region20: #{tpu_custom_call.1} parent=1 // pred_region
      %47 = dma.done [#allocation3], 256
    $region21: #{tpu_custom_call.1} parent=1 // pred_fallthru
      _
    %48 = vsyncpa [#allocation3], 1

</llo_original>
